<compile_context>
chip_gen: v7x
topology: tpu7x:2x2x1
jax: 0.10.0
libtpu: 0.0.40
codegen_flags: <defaults>
</compile_context>

<pallas_src>
import jax
import jax.numpy as jnp
from jax import lax
from jax.experimental import pallas as pl
from jax.experimental.pallas import tpu as pltpu


def seg_attention_kernel(x_ref, wk_ref, wq_ref, wv_ref, gamma_ref, beta_ref, o_ref):
    # x_ref: (1, N, D); w*_ref: (D, D) bf16 pre-transposed; gamma/beta: (1, D) f32
    x = x_ref[0].astype(jnp.float32)                       # (N, D) f32
    n = x.shape[0]

    # x_diff = x[0:N-1] - x[1:N]                           # (N-1, D)
    x_diff = x[0:n - 1, :] - x[1:n, :]
    seg_mean = jnp.mean(x_diff, axis=0, keepdims=True)     # (1, D) f32

    # bf16 operands for the MXU; accumulation stays f32.
    xd_b = x_diff.astype(jnp.bfloat16)                     # (N-1, D)
    wk = wk_ref[...]                                       # (D, D) bf16
    wq = wq_ref[...]
    wv = wv_ref[...]

    # K = seg_mean @ Wk^T                                   (1, D)
    k = jnp.dot(seg_mean.astype(jnp.bfloat16), wk,
                preferred_element_type=jnp.float32)

    # kq[0,i] = sum_o K[0,o] * wq_t[i,o]   (== K @ Wq)      (1, D)
    kq = lax.dot_general(k.astype(jnp.bfloat16), wq,
                         dimension_numbers=(((1,), (1,)), ((), ())),
                         preferred_element_type=jnp.float32)

    # energies = kq @ x_diff^T  (== K @ Q^T)                (1, N-1)
    energies = lax.dot_general(kq.astype(jnp.bfloat16), xd_b,
                               dimension_numbers=(((1,), (1,)), ((), ())),
                               preferred_element_type=jnp.float32)

    # softmax over last dim (f32)
    e_max = jnp.max(energies, axis=-1, keepdims=True)
    e_exp = jnp.exp(energies - e_max)
    scores = e_exp * pl.reciprocal(jnp.sum(e_exp, axis=-1, keepdims=True),
                                   approx=True)            # (1, N-1)

    # seg_embedding = (scores @ x_diff) @ Wv^T + seg_mean  (== scores @ V + seg_mean)
    xv = jnp.dot(scores.astype(jnp.bfloat16), xd_b,
                 preferred_element_type=jnp.float32)        # (1, D)
    seg_embedding = jnp.dot(xv.astype(jnp.bfloat16), wv,
                            preferred_element_type=jnp.float32) + seg_mean

    # LayerNorm over last dim, eps = 1e-6 (f32)
    mu = jnp.mean(seg_embedding, axis=-1, keepdims=True)
    xc = seg_embedding - mu
    var = jnp.mean(xc * xc, axis=-1, keepdims=True)
    inv_std = lax.rsqrt(var + 1e-6)
    normed = xc * inv_std * gamma_ref[...] + beta_ref[...]

    o_ref[0] = normed.astype(o_ref.dtype)                   # (1, D) into (1, 1, D) block


def seg_attention_batched(xs, wk_t, wq_t, wv_t, gamma, beta):
    """Batched forward over segments.

    xs: (S, N, D) f32;  w*_t: (D, D) bf16 pre-transposed (in, out);
    gamma/beta: (1, D) f32.  Returns (S, 1, D) f32.
    """
    s_count, n, d = xs.shape
    # Weights stay VMEM-resident across the grid (constant index_map).
    weight_spec = pl.BlockSpec((d, d), lambda s: (0, 0))
    vec_spec = pl.BlockSpec((1, d), lambda s: (0, 0))
    return pl.pallas_call(
        seg_attention_kernel,
        out_shape=jax.ShapeDtypeStruct((s_count, 1, d), jnp.float32),
        grid_spec=pltpu.PrefetchScalarGridSpec(
            num_scalar_prefetch=0,
            grid=(s_count,),
            in_specs=[
                pl.BlockSpec((1, n, d), lambda s: (s, 0, 0)),   # per-segment x tile
                weight_spec, weight_spec, weight_spec,           # resident weights
                vec_spec, vec_spec,                              # gamma, beta
            ],
            out_specs=pl.BlockSpec((1, 1, d), lambda s: (s, 0, 0)),
        ),
        compiler_params=pltpu.CompilerParams(
            # Segment axis is independent -> megacore sharding on v7x.
            dimension_semantics=("parallel",),
            # At D=128 everything trivially fits VMEM; for large D, tile the
            # weight out-feature dim and/or raise vmem_limit_bytes here.
        ),
    )(xs, wk_t, wq_t, wv_t, gamma, beta)


def seg_attention(x, wk_t, wq_t, wv_t, gamma, beta):
    """Single-segment forward matching SegAttention.forward: x (N, D) -> (1, D)."""
    return seg_attention_batched(x[None], wk_t, wq_t, wv_t, gamma, beta)[0]


if __name__ == "__main__":
    # Small shapes consistent with the module: seq N=9 (N-1=8 diffs), hidden D=128,
    # batched over S=4 segments.
    S, N, D = 4, 9, 128

    key = jax.random.PRNGKey(0)
    kx, kk, kq, kv = jax.random.split(key, 4)

    xs = jax.random.normal(kx, (S, N, D), dtype=jnp.float32)

    # Deterministic Linear weights (PyTorch-style uniform init), pre-transposed
    # to (in, out) and stored as bf16 for the MXU / DMA savings.
    bound = 1.0 / (D ** 0.5)
    wk_t = jax.random.uniform(kk, (D, D), jnp.float32, -bound, bound).astype(jnp.bfloat16)
    wq_t = jax.random.uniform(kq, (D, D), jnp.float32, -bound, bound).astype(jnp.bfloat16)
    wv_t = jax.random.uniform(kv, (D, D), jnp.float32, -bound, bound).astype(jnp.bfloat16)

    # LayerNorm default init: weight=1, bias=0.
    gamma = jnp.ones((1, D), jnp.float32)
    beta = jnp.zeros((1, D), jnp.float32)

    out = seg_attention_batched(xs, wk_t, wq_t, wv_t, gamma, beta)
    out = jax.block_until_ready(out)

    # Pure-JAX f32 reference (original module ordering) using the same
    # (bf16-rounded) weights upcast to f32.
    wk_f = wk_t.astype(jnp.float32)
    wq_f = wq_t.astype(jnp.float32)
    wv_f = wv_t.astype(jnp.float32)

    def ref_one(x):
        x_diff = x[:-1, :] - x[1:, :]
        seg_mean = jnp.mean(x_diff, axis=0, keepdims=True)
        K = seg_mean @ wk_f
        Q = x_diff @ wq_f
        V = x_diff @ wv_f
        scores = jax.nn.softmax(K @ Q.T, axis=-1)
        emb = scores @ V + seg_mean
        mu = jnp.mean(emb, axis=-1, keepdims=True)
        var = jnp.mean((emb - mu) ** 2, axis=-1, keepdims=True)
        return (emb - mu) / jnp.sqrt(var + 1e-6) * gamma + beta

    ref = jax.vmap(ref_one)(xs)  # (S, 1, D)

    assert out.shape == (S, 1, D)
    # bf16 matmul operands + approx reciprocal perturb rounding -> looser tolerance.
    assert jnp.allclose(out, ref, atol=5e-2, rtol=5e-2), float(jnp.max(jnp.abs(out - ref)))

    # Single-segment path (the module's exact forward signature): (N, D) -> (1, D).
    single = jax.block_until_ready(seg_attention(xs[0], wk_t, wq_t, wv_t, gamma, beta))
    assert single.shape == (1, D)
    assert jnp.allclose(single, ref[0], atol=5e-2, rtol=5e-2)

    print("KERNEL_OK")
</pallas_src>

<mosaic_0001>
module attributes {stable_mosaic.version = 11 : i64} {
  func.func @seg_attention_kernel(%arg0: i32, %arg1: memref<1x9x128xf32, #tpu.memory_space<vmem>>, %arg2: memref<128x128xbf16, #tpu.memory_space<vmem>>, %arg3: memref<128x128xbf16, #tpu.memory_space<vmem>>, %arg4: memref<128x128xbf16, #tpu.memory_space<vmem>>, %arg5: memref<1x128xf32, #tpu.memory_space<vmem>>, %arg6: memref<1x128xf32, #tpu.memory_space<vmem>>, %arg7: memref<1x1x128xf32, #tpu.memory_space<vmem>>) attributes {dimension_semantics = [#tpu.dimension_semantics<parallel>], iteration_bounds = array<i64: 4>, scalar_prefetch = 0 : i64, scratch_operands = 0 : i64, tpu.core_type = #tpu.core_type<tc>, window_params = [{transform_indices = @transform_0, window_bounds = array<i64: 1, 9, 128>}, {pipeline_mode = #tpu.pipeline_mode<synchronous>, transform_indices = @transform_1, window_bounds = array<i64: 128, 128>}, {pipeline_mode = #tpu.pipeline_mode<synchronous>, transform_indices = @transform_2, window_bounds = array<i64: 128, 128>}, {pipeline_mode = #tpu.pipeline_mode<synchronous>, transform_indices = @transform_3, window_bounds = array<i64: 128, 128>}, {pipeline_mode = #tpu.pipeline_mode<synchronous>, transform_indices = @transform_4, window_bounds = array<i64: 1, 128>}, {pipeline_mode = #tpu.pipeline_mode<synchronous>, transform_indices = @transform_5, window_bounds = array<i64: 1, 128>}, {transform_indices = @transform_6, window_bounds = array<i64: 1, 1, 128>}]} {
    %c0 = arith.constant 0 : index
    %c0_0 = arith.constant 0 : index
    %c0_1 = arith.constant 0 : index
    %0 = vector.load %arg1[%c0, %c0_0, %c0_1] : memref<1x9x128xf32, #tpu.memory_space<vmem>>, vector<1x9x128xf32>
    %1 = vector.shape_cast %0 : vector<1x9x128xf32> to vector<9x128xf32>
    %2 = vector.extract_strided_slice %1 {offsets = [0, 0], sizes = [8, 128], strides = [1, 1]} : vector<9x128xf32> to vector<8x128xf32>
    %3 = vector.extract_strided_slice %1 {offsets = [1, 0], sizes = [8, 128], strides = [1, 1]} : vector<9x128xf32> to vector<8x128xf32>
    %4 = arith.subf %2, %3 : vector<8x128xf32>
    %cst = arith.constant dense<0.000000e+00> : vector<128xf32>
    %5 = vector.multi_reduction <add>, %4, %cst [0] : vector<8x128xf32> to vector<128xf32>
    %6 = vector.shape_cast %5 : vector<128xf32> to vector<1x128xf32>
    %cst_2 = arith.constant 8.000000e+00 : f32
    %7 = vector.broadcast %cst_2 : f32 to vector<1x128xf32>
    %8 = arith.divf %6, %7 : vector<1x128xf32>
    %9 = arith.truncf %4 : vector<8x128xf32> to vector<8x128xbf16>
    %c0_3 = arith.constant 0 : index
    %c0_4 = arith.constant 0 : index
    %10 = vector.load %arg2[%c0_3, %c0_4] : memref<128x128xbf16, #tpu.memory_space<vmem>>, vector<128x128xbf16>
    %c0_5 = arith.constant 0 : index
    %c0_6 = arith.constant 0 : index
    %11 = vector.load %arg3[%c0_5, %c0_6] : memref<128x128xbf16, #tpu.memory_space<vmem>>, vector<128x128xbf16>
    %c0_7 = arith.constant 0 : index
    %c0_8 = arith.constant 0 : index
    %12 = vector.load %arg4[%c0_7, %c0_8] : memref<128x128xbf16, #tpu.memory_space<vmem>>, vector<128x128xbf16>
    %13 = arith.truncf %8 : vector<1x128xf32> to vector<1x128xbf16>
    %cst_9 = arith.constant dense<0.000000e+00> : vector<1x128xf32>
    %14 = tpu.matmul %13, %10, %cst_9 {dimension_numbers = #tpu.dot_dimension_numbers<[1], [0], [0], [1], [0, 0, 1, 1], [], []>} : vector<1x128xbf16>, vector<128x128xbf16>, vector<1x128xf32> -> vector<1x128xf32>
    %15 = arith.truncf %14 : vector<1x128xf32> to vector<1x128xbf16>
    %cst_10 = arith.constant dense<0.000000e+00> : vector<1x128xf32>
    %16 = tpu.matmul %15, %11, %cst_10 {dimension_numbers = #tpu.dot_dimension_numbers<[1], [1], [0], [0], [0, 0, 1, 0], [], []>} : vector<1x128xbf16>, vector<128x128xbf16>, vector<1x128xf32> -> vector<1x128xf32>
    %17 = arith.truncf %16 : vector<1x128xf32> to vector<1x128xbf16>
    %cst_11 = arith.constant dense<0.000000e+00> : vector<1x8xf32>
    %18 = tpu.matmul %17, %9, %cst_11 {dimension_numbers = #tpu.dot_dimension_numbers<[1], [1], [0], [0], [0, 0, 1, 0], [], []>} : vector<1x128xbf16>, vector<8x128xbf16>, vector<1x8xf32> -> vector<1x8xf32>
    %cst_12 = arith.constant dense<0xFF800000> : vector<1xf32>
    %19 = vector.multi_reduction <maximumf>, %18, %cst_12 [1] : vector<1x8xf32> to vector<1xf32>
    %20 = vector.shape_cast %19 : vector<1xf32> to vector<1x1xf32>
    %21 = vector.broadcast %20 : vector<1x1xf32> to vector<1x8xf32>
    %22 = arith.subf %18, %21 : vector<1x8xf32>
    %23 = math.exp %22 : vector<1x8xf32>
    %cst_13 = arith.constant dense<0.000000e+00> : vector<1xf32>
    %24 = vector.multi_reduction <add>, %23, %cst_13 [1] : vector<1x8xf32> to vector<1xf32>
    %25 = vector.shape_cast %24 : vector<1xf32> to vector<1x1xf32>
    %26 = tpu.reciprocal %25 {approx = true} : vector<1x1xf32> -> vector<1x1xf32>
    %27 = vector.broadcast %26 : vector<1x1xf32> to vector<1x8xf32>
    %28 = arith.mulf %23, %27 : vector<1x8xf32>
    %29 = arith.truncf %28 : vector<1x8xf32> to vector<1x8xbf16>
    %cst_14 = arith.constant dense<0.000000e+00> : vector<1x128xf32>
    %30 = tpu.matmul %29, %9, %cst_14 {dimension_numbers = #tpu.dot_dimension_numbers<[1], [0], [0], [1], [0, 0, 1, 1], [], []>} : vector<1x8xbf16>, vector<8x128xbf16>, vector<1x128xf32> -> vector<1x128xf32>
    %31 = arith.truncf %30 : vector<1x128xf32> to vector<1x128xbf16>
    %cst_15 = arith.constant dense<0.000000e+00> : vector<1x128xf32>
    %32 = tpu.matmul %31, %12, %cst_15 {dimension_numbers = #tpu.dot_dimension_numbers<[1], [0], [0], [1], [0, 0, 1, 1], [], []>} : vector<1x128xbf16>, vector<128x128xbf16>, vector<1x128xf32> -> vector<1x128xf32>
    %33 = arith.addf %32, %8 : vector<1x128xf32>
    %cst_16 = arith.constant dense<0.000000e+00> : vector<1xf32>
    %34 = vector.multi_reduction <add>, %33, %cst_16 [1] : vector<1x128xf32> to vector<1xf32>
    %35 = vector.shape_cast %34 : vector<1xf32> to vector<1x1xf32>
    %cst_17 = arith.constant 1.280000e+02 : f32
    %36 = vector.broadcast %cst_17 : f32 to vector<1x1xf32>
    %37 = arith.divf %35, %36 : vector<1x1xf32>
    %38 = vector.broadcast %37 : vector<1x1xf32> to vector<1x128xf32>
    %39 = arith.subf %33, %38 : vector<1x128xf32>
    %40 = arith.mulf %39, %39 : vector<1x128xf32>
    %cst_18 = arith.constant dense<0.000000e+00> : vector<1xf32>
    %41 = vector.multi_reduction <add>, %40, %cst_18 [1] : vector<1x128xf32> to vector<1xf32>
    %42 = vector.shape_cast %41 : vector<1xf32> to vector<1x1xf32>
    %cst_19 = arith.constant 1.280000e+02 : f32
    %43 = vector.broadcast %cst_19 : f32 to vector<1x1xf32>
    %44 = arith.divf %42, %43 : vector<1x1xf32>
    %cst_20 = arith.constant 9.99999997E-7 : f32
    %45 = vector.broadcast %cst_20 : f32 to vector<1x1xf32>
    %46 = arith.addf %44, %45 : vector<1x1xf32>
    %47 = math.rsqrt %46 : vector<1x1xf32>
    %48 = vector.broadcast %47 : vector<1x1xf32> to vector<1x128xf32>
    %49 = arith.mulf %39, %48 : vector<1x128xf32>
    %c0_21 = arith.constant 0 : index
    %c0_22 = arith.constant 0 : index
    %50 = vector.load %arg5[%c0_21, %c0_22] : memref<1x128xf32, #tpu.memory_space<vmem>>, vector<1x128xf32>
    %51 = arith.mulf %49, %50 : vector<1x128xf32>
    %c0_23 = arith.constant 0 : index
    %c0_24 = arith.constant 0 : index
    %52 = vector.load %arg6[%c0_23, %c0_24] : memref<1x128xf32, #tpu.memory_space<vmem>>, vector<1x128xf32>
    %53 = arith.addf %51, %52 : vector<1x128xf32>
    %c0_25 = arith.constant 0 : index
    %c0_26 = arith.constant 0 : index
    %c0_27 = arith.constant 0 : index
    %54 = vector.load %arg7[%c0_25, %c0_26, %c0_27] : memref<1x1x128xf32, #tpu.memory_space<vmem>>, vector<1x1x128xf32>
    %55 = vector.shape_cast %54 : vector<1x1x128xf32> to vector<1x128xf32>
    %56 = vector.shape_cast %53 : vector<1x128xf32> to vector<1x1x128xf32>
    tpu.vector_store %arg7[%c0_25, %c0_26, %c0_27], %56 {strides = array<i32>} : memref<1x1x128xf32, #tpu.memory_space<vmem>>, vector<1x1x128xf32>,
    return
  }
  func.func @transform_0(%arg0: i32) -> (i32, i32, i32) {
    %c0_i32 = arith.constant 0 : i32
    %c0_i32_0 = arith.constant 0 : i32
    %c0_i32_1 = arith.constant 0 : i32
    return %arg0, %c0_i32, %c0_i32_0 : i32, i32, i32
  }
  func.func @transform_1(%arg0: i32) -> (i32, i32) {
    %c0_i32 = arith.constant 0 : i32
    %c0_i32_0 = arith.constant 0 : i32
    %c0_i32_1 = arith.constant 0 : i32
    return %c0_i32, %c0_i32_0 : i32, i32
  }
  func.func @transform_2(%arg0: i32) -> (i32, i32) {
    %c0_i32 = arith.constant 0 : i32
    %c0_i32_0 = arith.constant 0 : i32
    %c0_i32_1 = arith.constant 0 : i32
    return %c0_i32, %c0_i32_0 : i32, i32
  }
  func.func @transform_3(%arg0: i32) -> (i32, i32) {
    %c0_i32 = arith.constant 0 : i32
    %c0_i32_0 = arith.constant 0 : i32
    %c0_i32_1 = arith.constant 0 : i32
    return %c0_i32, %c0_i32_0 : i32, i32
  }
  func.func @transform_4(%arg0: i32) -> (i32, i32) {
    %c0_i32 = arith.constant 0 : i32
    %c0_i32_0 = arith.constant 0 : i32
    %c0_i32_1 = arith.constant 0 : i32
    return %c0_i32, %c0_i32_0 : i32, i32
  }
  func.func @transform_5(%arg0: i32) -> (i32, i32) {
    %c0_i32 = arith.constant 0 : i32
    %c0_i32_0 = arith.constant 0 : i32
    %c0_i32_1 = arith.constant 0 : i32
    return %c0_i32, %c0_i32_0 : i32, i32
  }
  func.func @transform_6(%arg0: i32) -> (i32, i32, i32) {
    %c0_i32 = arith.constant 0 : i32
    %c0_i32_0 = arith.constant 0 : i32
    %c0_i32_1 = arith.constant 0 : i32
    return %arg0, %c0_i32, %c0_i32_0 : i32, i32, i32
  }
}

</mosaic_0001>

<llo_original>
// kernel: tpu_custom_call.1
$region0: #{tpu_custom_call.1}
  #allocation0 [shape = 'u32[]', space=smem, size = 0x4, offset = 0x4, fixed_abs, tag = 'smem constant byte address 0x4 - core index']
  #allocation1 [shape = 'u32[144,128]{1,0:T(1,128)}', space=vmem, size = 0x12000, scoped, tag = 'internal scratch']
  %s0 = inlined_call_operand.vmem [shape: f32[4,9,128], index: 0, kind: input, shape index: {}]
  %s1 = inlined_call_operand.vmem [shape: bf16[128,128], index: 1, kind: input, shape index: {}]
  %s2 = inlined_call_operand.hbm [shape: bf16[128,128], index: 2, kind: input, shape index: {}]
  %s3 = inlined_call_operand.hbm [shape: bf16[128,128], index: 3, kind: input, shape index: {}]
  %s4 = inlined_call_operand.vmem [shape: f32[1,128], index: 4, kind: input, shape index: {}]
  %s5 = inlined_call_operand.vmem [shape: f32[1,128], index: 5, kind: input, shape index: {}]
  %s6 = inlined_call_operand.hbm [shape: f32[4,1,128], index: 6, kind: output, shape index: {}]
  %s7 = sld [smem:[#allocation0]]
  $region65: #{tpu_custom_call.1} parent=0
    _
  %s9 = ssub.s32 1, %s7
  %s10 = scalar_select 0, %s9, %s7
  $region1: #{tpu_custom_call.1} parent=0
    #allocation2 [shape = 'u8[32768]{0}', space=vmem, size = 0x8000, scoped, tag = 'input window, operand 2, single buffered']
    #allocation3 [shape = 's32[2]{0}', space=sflag, size = 0x8, scoped, tag = 'scoped memory for tpu_custom_call.1']
    #allocation4 [shape = 's32[2]{0}', space=sflag, size = 0x8, scoped, tag = 'scoped memory for tpu_custom_call.1']
    #allocation5 [shape = 'u8[32768]{0}', space=vmem, size = 0x8000, scoped, tag = 'input window, operand 3, single buffered']
    #allocation6 [shape = 's32[1]{0}', space=sflag, size = 0x4, scoped, tag = 'scoped memory for tpu_custom_call.1']
    #allocation7 [shape = 'u8[1024]{0}', space=vmem, size = 0x400, scoped, tag = 'output window, operand 0']
    %11 = vsyncpa [#allocation3], 0
    %12 = vsyncpa [#allocation6], 0
    %13 = vsyncpa [#allocation4], 0
    %s14 = scalar_lea.sflag [#allocation4], 1
    %15 = vsyncpa %s14, 0
    loop: start=0, step=1, limit=6
    $region2: #{tpu_custom_call.1} parent=1 // loop_pre_header
      _
    $region3: #{tpu_custom_call.1} parent=1 // loop_header
      %s17 = sphi 0, %s21
      %p18 = scmp.ge.s32.totalorder %s17, 6
      %s27 = sphi 0, %s29
      %s30 = sphi 0, %s27
      %s31 = sphi 0, %s30
      %s47 = sphi 0, %s31
      %s51 = sphi 0, %s51
      %s53 = sphi 0, %s51
      %s54 = sphi 0, %s53
      %s68 = sphi 0, %s54
      %s72 = sphi 0, %s72
      %s74 = sphi 0, %s72
      %s75 = sphi 0, %s74
      %s89 = sphi 0, %s75
      %s93 = sphi 0, %s93
      %s95 = sphi 0, %s93
      %s96 = sphi 0, %s95
      %s110 = sphi 0, %s96
      %s114 = sphi 0, %s114
      %s116 = sphi 0, %s114
      %s117 = sphi 0, %s116
      %s131 = sphi 0, %s117
      %s135 = sphi 0, %s135
      %s137 = sphi 0, %s135
      %s138 = sphi 0, %s137
      %s152 = sphi 0, %s138
      %s158 = sphi 0, %s160
      %s161 = sphi 0, %s158
      %s162 = sphi 0, %s161
      %s178 = sphi 0, %s162
    $region4: #{tpu_custom_call.1} parent=1 // loop_header_branch
      %20 = sbr.rel (%p18) target = $region8
    $region5: #{tpu_custom_call.1} parent=1 // loop_body
      %s22 = ssub.s32 %s17, 1
      %s23 = ssub.s32 %s17, 2
      %s24 = sadd.s32 %s17, 1
      %s25 = ssub.s32 %s17, %s24
      %p26 = scmp.eq.s32.totalorder %s25, 0
      %s28 = sadd.s32 %s27, 1
      %s29 = scalar_select %p26, %s27, %s28
      %p32 = pneg %p26
      %p33 = scmp.eq.s32.totalorder %s17, 3
      %p34 = por %p32, %p33
      %p35 = scmp.ne.s32.totalorder %s27, %s30
      %p36 = scmp.eq.s32.totalorder %s17, 0
      %p37 = por %p35, %p36
      %p38 = scmp.ne.s32.totalorder %s27, %s30
      %p39 = scmp.eq.s32.totalorder %s22, 3
      %p40 = por %p38, %p39
      %p41 = scmp.ne.s32.totalorder %s30, %s31
      %p42 = scmp.eq.s32.totalorder %s22, 0
      %p43 = por %p41, %p42
      %p44 = scmp.ne.s32.totalorder %s30, %s31
      %p45 = scmp.eq.s32.totalorder %s23, 3
      %p46 = por %p44, %p45
      %p48 = scmp.ne.s32.totalorder %s31, %s47
      %p49 = scmp.eq.s32.totalorder %s23, 0
      %p50 = por %p48, %p49
      %s52 = sadd.s32 %s51, 1
      %p55 = scmp.eq.s32.totalorder %s17, 3
      %p56 = scmp.ne.s32.totalorder %s51, %s53
      %p57 = scmp.eq.s32.totalorder %s17, 0
      %p58 = por %p56, %p57
      %p59 = scmp.ne.s32.totalorder %s51, %s53
      %p60 = scmp.eq.s32.totalorder %s22, 3
      %p61 = por %p59, %p60
      %p62 = scmp.ne.s32.totalorder %s53, %s54
      %p63 = scmp.eq.s32.totalorder %s22, 0
      %p64 = por %p62, %p63
      %p65 = scmp.ne.s32.totalorder %s53, %s54
      %p66 = scmp.eq.s32.totalorder %s23, 3
      %p67 = por %p65, %p66
      %p69 = scmp.ne.s32.totalorder %s54, %s68
      %p70 = scmp.eq.s32.totalorder %s23, 0
      %p71 = por %p69, %p70
      %s73 = sadd.s32 %s72, 1
      %p76 = scmp.eq.s32.totalorder %s17, 3
      %p77 = scmp.ne.s32.totalorder %s72, %s74
      %p78 = scmp.eq.s32.totalorder %s17, 0
      %p79 = por %p77, %p78
      %p80 = scmp.ne.s32.totalorder %s72, %s74
      %p81 = scmp.eq.s32.totalorder %s22, 3
      %p82 = por %p80, %p81
      %p83 = scmp.ne.s32.totalorder %s74, %s75
      %p84 = scmp.eq.s32.totalorder %s22, 0
      %p85 = por %p83, %p84
      %p86 = scmp.ne.s32.totalorder %s74, %s75
      %p87 = scmp.eq.s32.totalorder %s23, 3
      %p88 = por %p86, %p87
      %p90 = scmp.ne.s32.totalorder %s75, %s89
      %p91 = scmp.eq.s32.totalorder %s23, 0
      %p92 = por %p90, %p91
      %s94 = sadd.s32 %s93, 1
      %p97 = scmp.eq.s32.totalorder %s17, 3
      %p98 = scmp.ne.s32.totalorder %s93, %s95
      %p99 = scmp.eq.s32.totalorder %s17, 0
      %p100 = por %p98, %p99
      %p101 = scmp.ne.s32.totalorder %s93, %s95
      %p102 = scmp.eq.s32.totalorder %s22, 3
      %p103 = por %p101, %p102
      %p104 = scmp.ne.s32.totalorder %s95, %s96
      %p105 = scmp.eq.s32.totalorder %s22, 0
      %p106 = por %p104, %p105
      %p107 = scmp.ne.s32.totalorder %s95, %s96
      %p108 = scmp.eq.s32.totalorder %s23, 3
      %p109 = por %p107, %p108
      %p111 = scmp.ne.s32.totalorder %s96, %s110
      %p112 = scmp.eq.s32.totalorder %s23, 0
      %p113 = por %p111, %p112
      %s115 = sadd.s32 %s114, 1
      %p118 = scmp.eq.s32.totalorder %s17, 3
      %p119 = scmp.ne.s32.totalorder %s114, %s116
      %p120 = scmp.eq.s32.totalorder %s17, 0
      %p121 = por %p119, %p120
      %p122 = scmp.ne.s32.totalorder %s114, %s116
      %p123 = scmp.eq.s32.totalorder %s22, 3
      %p124 = por %p122, %p123
      %p125 = scmp.ne.s32.totalorder %s116, %s117
      %p126 = scmp.eq.s32.totalorder %s22, 0
      %p127 = por %p125, %p126
      %p128 = scmp.ne.s32.totalorder %s116, %s117
      %p129 = scmp.eq.s32.totalorder %s23, 3
      %p130 = por %p128, %p129
      %p132 = scmp.ne.s32.totalorder %s117, %s131
      %p133 = scmp.eq.s32.totalorder %s23, 0
      %p134 = por %p132, %p133
      %s136 = sadd.s32 %s135, 1
      %p139 = scmp.eq.s32.totalorder %s17, 3
      %p140 = scmp.ne.s32.totalorder %s135, %s137
      %p141 = scmp.eq.s32.totalorder %s17, 0
      %p142 = por %p140, %p141
      %p143 = scmp.ne.s32.totalorder %s135, %s137
      %p144 = scmp.eq.s32.totalorder %s22, 3
      %p145 = por %p143, %p144
      %p146 = scmp.ne.s32.totalorder %s137, %s138
      %p147 = scmp.eq.s32.totalorder %s22, 0
      %p148 = por %p146, %p147
      %p149 = scmp.ne.s32.totalorder %s137, %s138
      %p150 = scmp.eq.s32.totalorder %s23, 3
      %p151 = por %p149, %p150
      %p153 = scmp.ne.s32.totalorder %s138, %s152
      %p154 = scmp.eq.s32.totalorder %s23, 0
      %p155 = por %p153, %p154
      %s156 = ssub.s32 %s17, %s24
      %p157 = scmp.eq.s32.totalorder %s156, 0
      %s159 = sadd.s32 %s158, 1
      %s160 = scalar_select %p157, %s158, %s159
      %p163 = pneg %p157
      %p164 = scmp.eq.s32.totalorder %s17, 3
      %p165 = por %p163, %p164
      %p166 = scmp.ne.s32.totalorder %s158, %s161
      %p167 = scmp.eq.s32.totalorder %s17, 0
      %p168 = por %p166, %p167
      %p169 = scmp.ne.s32.totalorder %s158, %s161
      %p170 = scmp.eq.s32.totalorder %s22, 3
      %p171 = por %p169, %p170
      %p172 = scmp.ne.s32.totalorder %s161, %s162
      %p173 = scmp.eq.s32.totalorder %s22, 0
      %p174 = por %p172, %p173
      %p175 = scmp.ne.s32.totalorder %s161, %s162
      %p176 = scmp.eq.s32.totalorder %s23, 3
      %p177 = por %p175, %p176
      %p179 = scmp.ne.s32.totalorder %s162, %s178
      %p180 = scmp.eq.s32.totalorder %s23, 0
      %p181 = por %p179, %p180
      %p182 = scmp.le.s32.totalorder 1, %s17
      %p183 = scmp.lt.s32.totalorder %s17, 5
      %p184 = pnand %p182, %p183
      %p185 = pneg %p184
      // Predicated region
      $region9: #{tpu_custom_call.1} parent=5 // pred_check
        _
      $region10: #{tpu_custom_call.1} parent=5 // pred_check_branch
        %187 = sbr.rel (%p184) target = $region12
      $region11: #{tpu_custom_call.1} parent=5 // pred_region
        %s188 = ssub.s32 %s17, 1
        // Predicated region
        $region13: #{tpu_custom_call.1} parent=11 // pred_check
          %p189 = pneg %p64
        $region14: #{tpu_custom_call.1} parent=11 // pred_check_branch
          %191 = sbr.rel (%p189) target = $region16
        $region15: #{tpu_custom_call.1} parent=11 // pred_region
          _
        $region16: #{tpu_custom_call.1} parent=11 // pred_fallthru
          _
        // Predicated region
        $region17: #{tpu_custom_call.1} parent=11 // pred_check
          %p192 = pneg %p85
        $region18: #{tpu_custom_call.1} parent=11 // pred_check_branch
          %194 = sbr.rel (%p192) target = $region20
        $region19: #{tpu_custom_call.1} parent=11 // pred_region
          %s196 = ssub.s32 1024, 1024
          %197 = vsyncadd [#allocation3], %s196
          %s198 = sshll.u32 [#allocation2], 4
          %s199 = int_to_ptr.vmem [resolvable:$true] %s198
          %204 = dma.hbm_to_vmem [thread:$0]  %s2, 1024, %s199, [#allocation3], 64, 64, 4
        $region20: #{tpu_custom_call.1} parent=11 // pred_fallthru
          _
        // Predicated region
        $region21: #{tpu_custom_call.1} parent=11 // pred_check
          %p205 = pneg %p106
        $region22: #{tpu_custom_call.1} parent=11 // pred_check_branch
          %207 = sbr.rel (%p205) target = $region24
        $region23: #{tpu_custom_call.1} parent=11 // pred_region
          %s209 = ssub.s32 1024, 1024
          %210 = vsyncadd [#allocation6], %s209
          %s211 = sshll.u32 [#allocation5], 4
          %s212 = int_to_ptr.vmem [resolvable:$true] %s211
          %217 = dma.hbm_to_vmem [thread:$0]  %s3, 1024, %s212, [#allocation6], 64, 64, 4
        $region24: #{tpu_custom_call.1} parent=11 // pred_fallthru
          _
        // Predicated region
        $region25: #{tpu_custom_call.1} parent=11 // pred_check
          %p218 = pneg %p127
        $region26: #{tpu_custom_call.1} parent=11 // pred_check_branch
          %220 = sbr.rel (%p218) target = $region28
        $region27: #{tpu_custom_call.1} parent=11 // pred_region
          _
        $region28: #{tpu_custom_call.1} parent=11 // pred_fallthru
          _
        // Predicated region
        $region29: #{tpu_custom_call.1} parent=11 // pred_check
          %p221 = pneg %p148
        $region30: #{tpu_custom_call.1} parent=11 // pred_check_branch
          %223 = sbr.rel (%p221) target = $region32
        $region31: #{tpu_custom_call.1} parent=11 // pred_region
          _
        $region32: #{tpu_custom_call.1} parent=11 // pred_fallthru
          _
      $region12: #{tpu_custom_call.1} parent=5 // pred_fallthru
        _
      %p224 = scmp.lt.s32.totalorder %s17, 4
      // Predicated region
      $region33: #{tpu_custom_call.1} parent=5 // pred_check
        %p225 = pneg %p224
      $region34: #{tpu_custom_call.1} parent=5 // pred_check_branch
        %227 = sbr.rel (%p225) target = $region36
      $region35: #{tpu_custom_call.1} parent=5 // pred_region
        // Predicated region
        $region37: #{tpu_custom_call.1} parent=35 // pred_check
          %p228 = pneg %p37
        $region38: #{tpu_custom_call.1} parent=35 // pred_check_branch
          %230 = sbr.rel (%p228) target = $region40
        $region39: #{tpu_custom_call.1} parent=35 // pred_region
          %p231 = scmp.lt.s32.totalorder %s17, 3
          %s232 = scalar_select %p231, %s17, 3
          %s233 = smul.addr %s232, 2
          %s234 = smul.addr %s233, 8
          %s235 = scalar_lea.vmem %s0, %s234
        $region40: #{tpu_custom_call.1} parent=35 // pred_fallthru
          _
      $region36: #{tpu_custom_call.1} parent=5 // pred_fallthru
        _
      %p236 = scmp.le.s32.totalorder 1, %s17
      %p237 = scmp.lt.s32.totalorder %s17, 5
      %p238 = pnand %p236, %p237
      %p239 = pneg %p238
      // Predicated region
      $region41: #{tpu_custom_call.1} parent=5 // pred_check
        _
      $region42: #{tpu_custom_call.1} parent=5 // pred_check_branch
        %241 = sbr.rel (%p238) target = $region44
      $region43: #{tpu_custom_call.1} parent=5 // pred_region
        %s242 = ssub.s32 %s17, 1
        // Predicated region
        $region45: #{tpu_custom_call.1} parent=43 // pred_check
          %p243 = pneg %p85
        $region46: #{tpu_custom_call.1} parent=43 // pred_check_branch
          %245 = sbr.rel (%p243) target = $region48
        $region47: #{tpu_custom_call.1} parent=43 // pred_region
          %246 = dma.done [#allocation3], 1024
        $region48: #{tpu_custom_call.1} parent=43 // pred_fallthru
          _
        // Predicated region
        $region49: #{tpu_custom_call.1} parent=43 // pred_check
          %p247 = pneg %p106
        $region50: #{tpu_custom_call.1} parent=43 // pred_check_branch
          %249 = sbr.rel (%p247) target = $region52
        $region51: #{tpu_custom_call.1} parent=43 // pred_region
          %250 = dma.done [#allocation6], 1024
        $region52: #{tpu_custom_call.1} parent=43 // pred_fallthru
          _
        %p251 = scmp.lt.s32.totalorder %s22, 3
        %s252 = scalar_select %p251, %s22, 3
        %s253 = smul.addr %s252, 2
        %s254 = smul.addr %s253, 8
        %s255 = scalar_lea.vmem %s0, %s254
        %p256 = pneg %p43
        %p257 = pneg %p40
        %p258 = pneg %p64
        %p259 = pneg %p61
        %p260 = pneg %p85
        %p261 = pneg %p82
        %p262 = pneg %p106
        %p263 = pneg %p103
        %p264 = pneg %p127
        %p265 = pneg %p124
        %p266 = pneg %p148
        %p267 = pneg %p145
        %p268 = pneg %p174
        %p269 = pneg %p171
        %s270 = sand.u32 %s161, 1
        %s271 = scalar_lea.sflag [#allocation4], %s270
        %s272 = sand.u32 %s161, 1
        %s273 = scalar_lea.vmem [#allocation7], %s272
        %p274 = scmp.lt.s32.totalorder %s22, 3
        %s275 = scalar_select %p274, %s22, 3
        %s276 = smul.addr %s275, 2
        %s277 = smul.addr %s276, 8
        %s278 = scalar_lea.vmem %s0, %s277
        %v280 = vld [vmem:[%s278] sm:$0xff]
        %v281 = vld [vmem:[%s278 + $0x8] sm:$0x1]
        %vm284 = vcmask 1046528
        %v285 = vrot.slane %v280, 1
        %v286 = vrot.slane %v281, 1
        %v287 = vsel %vm284, %v285, %v286
        %v289 = vsub.f32 %v280, %v287
        %v290 = vrot.slane %v289, 4
        %v291 = vadd.f32 %v289, %v290
        %v292 = vrot.slane %v291, 2
        %v293 = vadd.f32 %v291, %v292
        %v294 = vrot.slane %v293, 1
        %v295 = vadd.f32 %v293, %v294
        %v296 = vrcp.pop 8.0
        %v297 = vmul.f32 %v295, %v296
        %v298 = vpack.c.bf16 %v289, %v289
        %v299 = vld [vmem:[%s1] sm:$0xf]
        %v300 = vld [vmem:[%s1 + $0x4] sm:$0xf]
        %v301 = vld [vmem:[%s1 + $0x8] sm:$0xf]
        %v302 = vld [vmem:[%s1 + $0xc] sm:$0xf]
        %v303 = vld [vmem:[%s1 + $0x10] sm:$0xf]
        %v304 = vld [vmem:[%s1 + $0x14] sm:$0xf]
        %v305 = vld [vmem:[%s1 + $0x18] sm:$0xf]
        %v306 = vld [vmem:[%s1 + $0x1c] sm:$0xf]
        %v307 = vld [vmem:[%s1 + $0x20] sm:$0xf]
        %v308 = vld [vmem:[%s1 + $0x24] sm:$0xf]
        %v309 = vld [vmem:[%s1 + $0x28] sm:$0xf]
        %v310 = vld [vmem:[%s1 + $0x2c] sm:$0xf]
        %v311 = vld [vmem:[%s1 + $0x30] sm:$0xf]
        %v312 = vld [vmem:[%s1 + $0x34] sm:$0xf]
        %v313 = vld [vmem:[%s1 + $0x38] sm:$0xf]
        %v314 = vld [vmem:[%s1 + $0x3c] sm:$0xf]
        %v315 = vld [vmem:[#allocation2] sm:$0xf]
        %v316 = vld [vmem:[#allocation2 + $0x4] sm:$0xf]
        %v317 = vld [vmem:[#allocation2 + $0x8] sm:$0xf]
        %v318 = vld [vmem:[#allocation2 + $0xc] sm:$0xf]
        %v319 = vld [vmem:[#allocation2 + $0x10] sm:$0xf]
        %v320 = vld [vmem:[#allocation2 + $0x14] sm:$0xf]
        %v321 = vld [vmem:[#allocation2 + $0x18] sm:$0xf]
        %v322 = vld [vmem:[#allocation2 + $0x1c] sm:$0xf]
        %v323 = vld [vmem:[#allocation2 + $0x20] sm:$0xf]
        %v324 = vld [vmem:[#allocation2 + $0x24] sm:$0xf]
        %v325 = vld [vmem:[#allocation2 + $0x28] sm:$0xf]
        %v326 = vld [vmem:[#allocation2 + $0x2c] sm:$0xf]
        %v327 = vld [vmem:[#allocation2 + $0x30] sm:$0xf]
        %v328 = vld [vmem:[#allocation2 + $0x34] sm:$0xf]
        %v329 = vld [vmem:[#allocation2 + $0x38] sm:$0xf]
        %v330 = vld [vmem:[#allocation2 + $0x3c] sm:$0xf]
        %v331 = vld [vmem:[#allocation5] sm:$0xf]
        %v332 = vld [vmem:[#allocation5 + $0x4] sm:$0xf]
        %v333 = vld [vmem:[#allocation5 + $0x8] sm:$0xf]
        %v334 = vld [vmem:[#allocation5 + $0xc] sm:$0xf]
        %v335 = vld [vmem:[#allocation5 + $0x10] sm:$0xf]
        %v336 = vld [vmem:[#allocation5 + $0x14] sm:$0xf]
        %v337 = vld [vmem:[#allocation5 + $0x18] sm:$0xf]
        %v338 = vld [vmem:[#allocation5 + $0x1c] sm:$0xf]
        %v339 = vld [vmem:[#allocation5 + $0x20] sm:$0xf]
        %v340 = vld [vmem:[#allocation5 + $0x24] sm:$0xf]
        %v341 = vld [vmem:[#allocation5 + $0x28] sm:$0xf]
        %v342 = vld [vmem:[#allocation5 + $0x2c] sm:$0xf]
        %v343 = vld [vmem:[#allocation5 + $0x30] sm:$0xf]
        %v344 = vld [vmem:[#allocation5 + $0x34] sm:$0xf]
        %v345 = vld [vmem:[#allocation5 + $0x38] sm:$0xf]
        %v346 = vld [vmem:[#allocation5 + $0x3c] sm:$0xf]
        %v347 = vpack.c.bf16 %v297, %v297
        %v364 = vunpack.c.l.b16 %v299
        %v365 = vunpack.c.l.b16 %v300
        %v366 = vunpack.c.l.b16 %v301
        %v367 = vunpack.c.l.b16 %v302
        %v368 = vunpack.c.l.b16 %v303
        %v369 = vunpack.c.l.b16 %v304
        %v370 = vunpack.c.l.b16 %v305
        %v371 = vunpack.c.l.b16 %v306
        %v372 = vunpack.c.l.b16 %v307
        %v373 = vunpack.c.l.b16 %v308
        %v374 = vunpack.c.l.b16 %v309
        %v375 = vunpack.c.l.b16 %v310
        %v376 = vunpack.c.l.b16 %v311
        %v377 = vunpack.c.l.b16 %v312
        %v378 = vunpack.c.l.b16 %v313
        %v379 = vunpack.c.l.b16 %v314
        %v380 = vpack.c.b16 %v365, %v364
        %v381 = vpack.c.b16 %v367, %v366
        %v382 = vpack.c.b16 %v369, %v368
        %v383 = vpack.c.b16 %v371, %v370
        %v384 = vpack.c.b16 %v373, %v372
        %v385 = vpack.c.b16 %v375, %v374
        %v386 = vpack.c.b16 %v377, %v376
        %v387 = vpack.c.b16 %v379, %v378
        %396 = vmatprep.subr.bf16.mxu0 0
        %397 = vmatpush1.bf16.msra.mxu0 %v380
        %398 = vmatprep.subr.bf16.mxu0 0
        %399 = vmatpush1.bf16.msra.mxu0 %v381
        %400 = vmatprep.subr.bf16.mxu0 0
        %401 = vmatpush1.bf16.msra.mxu0 %v382
        %402 = vmatprep.subr.bf16.mxu0 0
        %403 = vmatpush1.bf16.msra.mxu0 %v383
        %404 = vmatprep.subr.bf16.mxu0 0
        %405 = vmatpush1.bf16.msra.mxu0 %v384
        %406 = vmatprep.subr.bf16.mxu0 0
        %407 = vmatpush1.bf16.msra.mxu0 %v385
        %408 = vmatprep.subr.bf16.mxu0 0
        %409 = vmatpush1.bf16.msra.mxu0 %v386
        %410 = vmatprep.subr.bf16.mxu0 0
        %411 = vmatpush1.bf16.msra.mxu0 %v387
        %412 = vmatprep.subr.bf16.mxu0 0
        %413 = vmatpush1.bf16.msra.mxu0 0
        %414 = vmatprep.subr.bf16.mxu0 0
        %415 = vmatpush1.bf16.msra.mxu0 0
        %416 = vmatprep.subr.bf16.mxu0 0
        %417 = vmatpush1.bf16.msra.mxu0 0
        %418 = vmatprep.subr.bf16.mxu0 0
        %419 = vmatpush1.bf16.msra.mxu0 0
        %420 = vmatprep.subr.bf16.mxu0 0
        %421 = vmatpush1.bf16.msra.mxu0 0
        %422 = vmatprep.subr.bf16.mxu0 0
        %423 = vmatpush1.bf16.msra.mxu0 0
        %424 = vmatprep.subr.bf16.mxu0 0
        %425 = vmatpush1.bf16.msra.mxu0 0
        %426 = vmatprep.subr.bf16.mxu0 0
        %427 = vmatpush1.bf16.msra.mxu0 0
        %428 = vmatprep.mubr.bf16.mxu0 0
        %429 = vmatmul.mubr.bf16.gmra.mrb[0].mxu0 %v347
        %v430 = vpop.f32.mrb[0].mxu0
        %v431 = vadd.f32 0.0, %v430
        %v432 = vpop.f32.mrb[0].mxu0
        %v433 = vpop.f32.mrb[0].mxu0
        %v434 = vpop.f32.mrb[0].mxu0
        %435 = vdwg.mxu0
        %v436 = vpack.c.bf16 %v431, %v431
        %v453 = vunpack.c.l.b16 %v315
        %v454 = vunpack.c.l.b16 %v316
        %v455 = vunpack.c.l.b16 %v317
        %v456 = vunpack.c.l.b16 %v318
        %v457 = vunpack.c.l.b16 %v319
        %v458 = vunpack.c.l.b16 %v320
        %v459 = vunpack.c.l.b16 %v321
        %v460 = vunpack.c.l.b16 %v322
        %v461 = vunpack.c.l.b16 %v323
        %v462 = vunpack.c.l.b16 %v324
        %v463 = vunpack.c.l.b16 %v325
        %v464 = vunpack.c.l.b16 %v326
        %v465 = vunpack.c.l.b16 %v327
        %v466 = vunpack.c.l.b16 %v328
        %v467 = vunpack.c.l.b16 %v329
        %v468 = vunpack.c.l.b16 %v330
        %v469 = vpack.c.b16 %v454, %v453
        %v470 = vpack.c.b16 %v456, %v455
        %v471 = vpack.c.b16 %v458, %v457
        %v472 = vpack.c.b16 %v460, %v459
        %v473 = vpack.c.b16 %v462, %v461
        %v474 = vpack.c.b16 %v464, %v463
        %v475 = vpack.c.b16 %v466, %v465
        %v476 = vpack.c.b16 %v468, %v467
        %485 = vmatprep.subr.bf16.mxu0 0
        %486 = vmatpush1.bf16.xpose.msra.mxu0 %v469
        %487 = vmatprep.subr.bf16.mxu0 0
        %488 = vmatpush1.bf16.xpose.msra.mxu0 %v470
        %489 = vmatprep.subr.bf16.mxu0 0
        %490 = vmatpush1.bf16.xpose.msra.mxu0 %v471
        %491 = vmatprep.subr.bf16.mxu0 0
        %492 = vmatpush1.bf16.xpose.msra.mxu0 %v472
        %493 = vmatprep.subr.bf16.mxu0 0
        %494 = vmatpush1.bf16.xpose.msra.mxu0 %v473
        %495 = vmatprep.subr.bf16.mxu0 0
        %496 = vmatpush1.bf16.xpose.msra.mxu0 %v474
        %497 = vmatprep.subr.bf16.mxu0 0
        %498 = vmatpush1.bf16.xpose.msra.mxu0 %v475
        %499 = vmatprep.subr.bf16.mxu0 0
        %500 = vmatpush1.bf16.xpose.msra.mxu0 %v476
        %501 = vmatprep.subr.bf16.mxu0 0
        %502 = vmatpush1.bf16.xpose.msra.mxu0 0
        %503 = vmatprep.subr.bf16.mxu0 0
        %504 = vmatpush1.bf16.xpose.msra.mxu0 0
        %505 = vmatprep.subr.bf16.mxu0 0
        %506 = vmatpush1.bf16.xpose.msra.mxu0 0
        %507 = vmatprep.subr.bf16.mxu0 0
        %508 = vmatpush1.bf16.xpose.msra.mxu0 0
        %509 = vmatprep.subr.bf16.mxu0 0
        %510 = vmatpush1.bf16.xpose.msra.mxu0 0
        %511 = vmatprep.subr.bf16.mxu0 0
        %512 = vmatpush1.bf16.xpose.msra.mxu0 0
        %513 = vmatprep.subr.bf16.mxu0 0
        %514 = vmatpush1.bf16.xpose.msra.mxu0 0
        %515 = vmatprep.subr.bf16.mxu0 0
        %516 = vmatpush1.bf16.xpose.msra.mxu0 0
        %517 = vmatprep.mubr.bf16.mxu0 0
        %518 = vmatmul.mubr.bf16.gmra.mrb[0].mxu0 %v436
        %v519 = vpop.f32.mrb[0].mxu0
        %v520 = vadd.f32 0.0, %v519
        %v521 = vpop.f32.mrb[0].mxu0
        %v522 = vpop.f32.mrb[0].mxu0
        %v523 = vpop.f32.mrb[0].mxu0
        %524 = vdwg.mxu0
        %v525 = vpack.c.bf16 %v520, %v520
        %526 = vmatprep.subr.bf16.mxu0 0
        %527 = vmatpush1.bf16.xpose.msra.mxu0 %v298
        %528 = vmatprep.subr.bf16.mxu0 0
        %529 = vmatpush1.bf16.xpose.msra.mxu0 0
        %530 = vmatprep.subr.bf16.mxu0 0
        %531 = vmatpush1.bf16.xpose.msra.mxu0 0
        %532 = vmatprep.subr.bf16.mxu0 0
        %533 = vmatpush1.bf16.xpose.msra.mxu0 0
        %534 = vmatprep.subr.bf16.mxu0 0
        %535 = vmatpush1.bf16.xpose.msra.mxu0 0
        %536 = vmatprep.subr.bf16.mxu0 0
        %537 = vmatpush1.bf16.xpose.msra.mxu0 0
        %538 = vmatprep.subr.bf16.mxu0 0
        %539 = vmatpush1.bf16.xpose.msra.mxu0 0
        %540 = vmatprep.subr.bf16.mxu0 0
        %541 = vmatpush1.bf16.xpose.msra.mxu0 0
        %542 = vmatprep.subr.bf16.mxu0 0
        %543 = vmatpush1.bf16.xpose.msra.mxu0 0
        %544 = vmatprep.subr.bf16.mxu0 0
        %545 = vmatpush1.bf16.xpose.msra.mxu0 0
        %546 = vmatprep.subr.bf16.mxu0 0
        %547 = vmatpush1.bf16.xpose.msra.mxu0 0
        %548 = vmatprep.subr.bf16.mxu0 0
        %549 = vmatpush1.bf16.xpose.msra.mxu0 0
        %550 = vmatprep.subr.bf16.mxu0 0
        %551 = vmatpush1.bf16.xpose.msra.mxu0 0
        %552 = vmatprep.subr.bf16.mxu0 0
        %553 = vmatpush1.bf16.xpose.msra.mxu0 0
        %554 = vmatprep.subr.bf16.mxu0 0
        %555 = vmatpush1.bf16.xpose.msra.mxu0 0
        %556 = vmatprep.subr.bf16.mxu0 0
        %557 = vmatpush1.bf16.xpose.msra.mxu0 0
        %558 = vmatprep.mubr.bf16.mxu0 0
        %559 = vmatmul.mubr.bf16.gmra.mrb[0].mxu0 %v525
        %v560 = vpop.f32.mrb[0].mxu0
        %v561 = vadd.f32 0.0, %v560
        %v562 = vpop.f32.mrb[0].mxu0
        %v563 = vpop.f32.mrb[0].mxu0
        %v564 = vpop.f32.mrb[0].mxu0
        %565 = vdwg.mxu0
        %vm566 = vcmask 57344
        %v567 = vsel %vm566, %v561, -inf
        %568 = vmax.xlane.f32.xlu0 %v567
        %v569 = vpop.xlane.xlu0 %568
        %v570 = vsub.f32 %v561, %v569
        %v571 = vmul.f32 %v570, 1.442695
        %v572 = vpow.pop %v571
        %v573 = vsel %vm566, %v572, 0.0
        %574 = vadd.xlane.f32.xlu0 %v573
        %v575 = vpop.xlane.xlu0 %574
        %v576 = vrcp.pop %v575
        %v577 = vmul.f32 %v572, %v576
        %v578 = vpack.c.bf16 %v577, %v577
        %vm579 = vcmask 64512
        %v581 = vsel %vm579, %v578, 0
        %vm583 = vcmask 1043456
        %v585 = vsel %vm583, %v298, 0
        %587 = vmatprep.subr.bf16.mxu0 0
        %588 = vmatpush1.bf16.msra.mxu0 %v585
        %589 = vmatprep.subr.bf16.mxu0 0
        %590 = vmatpush1.bf16.msra.mxu0 0
        %591 = vmatprep.subr.bf16.mxu0 0
        %592 = vmatpush1.bf16.msra.mxu0 0
        %593 = vmatprep.subr.bf16.mxu0 0
        %594 = vmatpush1.bf16.msra.mxu0 0
        %595 = vmatprep.subr.bf16.mxu0 0
        %596 = vmatpush1.bf16.msra.mxu0 0
        %597 = vmatprep.subr.bf16.mxu0 0
        %598 = vmatpush1.bf16.msra.mxu0 0
        %599 = vmatprep.subr.bf16.mxu0 0
        %600 = vmatpush1.bf16.msra.mxu0 0
        %601 = vmatprep.subr.bf16.mxu0 0
        %602 = vmatpush1.bf16.msra.mxu0 0
        %603 = vmatprep.subr.bf16.mxu0 0
        %604 = vmatpush1.bf16.msra.mxu0 0
        %605 = vmatprep.subr.bf16.mxu0 0
        %606 = vmatpush1.bf16.msra.mxu0 0
        %607 = vmatprep.subr.bf16.mxu0 0
        %608 = vmatpush1.bf16.msra.mxu0 0
        %609 = vmatprep.subr.bf16.mxu0 0
        %610 = vmatpush1.bf16.msra.mxu0 0
        %611 = vmatprep.subr.bf16.mxu0 0
        %612 = vmatpush1.bf16.msra.mxu0 0
        %613 = vmatprep.subr.bf16.mxu0 0
        %614 = vmatpush1.bf16.msra.mxu0 0
        %615 = vmatprep.subr.bf16.mxu0 0
        %616 = vmatpush1.bf16.msra.mxu0 0
        %617 = vmatprep.subr.bf16.mxu0 0
        %618 = vmatpush1.bf16.msra.mxu0 0
        %619 = vmatprep.mubr.bf16.mxu0 0
        %620 = vmatmul.mubr.bf16.gmra.mrb[0].mxu0 %v581
        %v621 = vpop.f32.mrb[0].mxu0
        %v622 = vadd.f32 0.0, %v621
        %v623 = vpop.f32.mrb[0].mxu0
        %v624 = vpop.f32.mrb[0].mxu0
        %v625 = vpop.f32.mrb[0].mxu0
        %626 = vdwg.mxu0
        %v627 = vpack.c.bf16 %v622, %v622
        %v644 = vunpack.c.l.b16 %v331
        %v645 = vunpack.c.l.b16 %v332
        %v646 = vunpack.c.l.b16 %v333
        %v647 = vunpack.c.l.b16 %v334
        %v648 = vunpack.c.l.b16 %v335
        %v649 = vunpack.c.l.b16 %v336
        %v650 = vunpack.c.l.b16 %v337
        %v651 = vunpack.c.l.b16 %v338
        %v652 = vunpack.c.l.b16 %v339
        %v653 = vunpack.c.l.b16 %v340
        %v654 = vunpack.c.l.b16 %v341
        %v655 = vunpack.c.l.b16 %v342
        %v656 = vunpack.c.l.b16 %v343
        %v657 = vunpack.c.l.b16 %v344
        %v658 = vunpack.c.l.b16 %v345
        %v659 = vunpack.c.l.b16 %v346
        %v660 = vpack.c.b16 %v645, %v644
        %v661 = vpack.c.b16 %v647, %v646
        %v662 = vpack.c.b16 %v649, %v648
        %v663 = vpack.c.b16 %v651, %v650
        %v664 = vpack.c.b16 %v653, %v652
        %v665 = vpack.c.b16 %v655, %v654
        %v666 = vpack.c.b16 %v657, %v656
        %v667 = vpack.c.b16 %v659, %v658
        %676 = vmatprep.subr.bf16.mxu0 0
        %677 = vmatpush1.bf16.msra.mxu0 %v660
        %678 = vmatprep.subr.bf16.mxu0 0
        %679 = vmatpush1.bf16.msra.mxu0 %v661
        %680 = vmatprep.subr.bf16.mxu0 0
        %681 = vmatpush1.bf16.msra.mxu0 %v662
        %682 = vmatprep.subr.bf16.mxu0 0
        %683 = vmatpush1.bf16.msra.mxu0 %v663
        %684 = vmatprep.subr.bf16.mxu0 0
        %685 = vmatpush1.bf16.msra.mxu0 %v664
        %686 = vmatprep.subr.bf16.mxu0 0
        %687 = vmatpush1.bf16.msra.mxu0 %v665
        %688 = vmatprep.subr.bf16.mxu0 0
        %689 = vmatpush1.bf16.msra.mxu0 %v666
        %690 = vmatprep.subr.bf16.mxu0 0
        %691 = vmatpush1.bf16.msra.mxu0 %v667
        %692 = vmatprep.subr.bf16.mxu0 0
        %693 = vmatpush1.bf16.msra.mxu0 0
        %694 = vmatprep.subr.bf16.mxu0 0
        %695 = vmatpush1.bf16.msra.mxu0 0
        %696 = vmatprep.subr.bf16.mxu0 0
        %697 = vmatpush1.bf16.msra.mxu0 0
        %698 = vmatprep.subr.bf16.mxu0 0
        %699 = vmatpush1.bf16.msra.mxu0 0
        %700 = vmatprep.subr.bf16.mxu0 0
        %701 = vmatpush1.bf16.msra.mxu0 0
        %702 = vmatprep.subr.bf16.mxu0 0
        %703 = vmatpush1.bf16.msra.mxu0 0
        %704 = vmatprep.subr.bf16.mxu0 0
        %705 = vmatpush1.bf16.msra.mxu0 0
        %706 = vmatprep.subr.bf16.mxu0 0
        %707 = vmatpush1.bf16.msra.mxu0 0
        %708 = vmatprep.mubr.bf16.mxu0 0
        %709 = vmatmul.mubr.bf16.gmra.mrb[0].mxu0 %v627
        %v710 = vpop.f32.mrb[0].mxu0
        %v711 = vadd.f32 %v297, %v710
        %v712 = vpop.f32.mrb[0].mxu0
        %v713 = vpop.f32.mrb[0].mxu0
        %v714 = vpop.f32.mrb[0].mxu0
        %715 = vdwg.mxu0
        %vm716 = vcmask 1040384
        %v717 = vsel %vm716, %v711, 0.0
        %718 = vadd.xlane.f32.xlu0 %v717
        %v719 = vpop.xlane.xlu0 %718
        %v720 = vrcp.pop 128.0
        %v721 = vmul.f32 %v719, %v720
        %v722 = vsub.f32 %v711, %v721
        %v723 = vmul.f32 %v722, %v722
        %v724 = vsel %vm716, %v723, 0.0
        %725 = vadd.xlane.f32.xlu0 %v724
        %v726 = vpop.xlane.xlu0 %725
        %v727 = vmul.f32 %v726, %v720
        %v728 = vadd.f32 %v727, 1e-06
        %v729 = vrsqrt.pop %v728
        %v730 = vmul.f32 %v722, %v729
        %v731 = vld [vmem:[%s4] sm:$0x1]
        %v732 = vmul.f32 %v730, %v731
        %v733 = vld [vmem:[%s5] sm:$0x1]
        %v734 = vadd.f32 %v732, %v733
        %735 = vst [vmem:[%s273] sm:$0x1] %v734
        %s736 = sand.u32 %s161, 1
        %s737 = scalar_lea.sflag [#allocation4], %s736
        %s738 = sand.u32 %s161, 1
        %s739 = scalar_lea.vmem [#allocation7], %s738
        // Predicated region
        $region53: #{tpu_custom_call.1} parent=43 // pred_check
          %p740 = pneg %p171
        $region54: #{tpu_custom_call.1} parent=43 // pred_check_branch
          %742 = sbr.rel (%p740) target = $region56
        $region55: #{tpu_custom_call.1} parent=43 // pred_region
          %s744 = ssub.s32 16, 16
          %745 = vsyncadd %s737, %s744
          %s746 = smul.addr %s22, 16
          %s747 = scalar_lea.hbm %s6, %s746
          %s749 = sshll.u32 %s739, 4
          %s750 = int_to_ptr.vmem [resolvable:$true] %s749
          %752 = dma.vmem_to_hbm [thread:$0]  %s750, 16, %s747, %s737
        $region56: #{tpu_custom_call.1} parent=43 // pred_fallthru
          _
      $region44: #{tpu_custom_call.1} parent=5 // pred_fallthru
        _
      %p753 = scmp.le.s32.totalorder 2, %s17
      // Predicated region
      $region57: #{tpu_custom_call.1} parent=5 // pred_check
        %p754 = pneg %p753
      $region58: #{tpu_custom_call.1} parent=5 // pred_check_branch
        %756 = sbr.rel (%p754) target = $region60
      $region59: #{tpu_custom_call.1} parent=5 // pred_region
        %s757 = ssub.s32 %s17, 2
        // Predicated region
        $region61: #{tpu_custom_call.1} parent=59 // pred_check
          %p758 = pneg %p177
        $region62: #{tpu_custom_call.1} parent=59 // pred_check_branch
          %760 = sbr.rel (%p758) target = $region64
        $region63: #{tpu_custom_call.1} parent=59 // pred_region
          %s761 = sand.u32 %s162, 1
          %s762 = scalar_lea.sflag [#allocation4], %s761
          %s763 = sand.u32 %s162, 1
          %s764 = scalar_lea.vmem [#allocation7], %s763
          %765 = dma.done %s762, 16
        $region64: #{tpu_custom_call.1} parent=59 // pred_fallthru
          _
      $region60: #{tpu_custom_call.1} parent=5 // pred_fallthru
        _
    $region6: #{tpu_custom_call.1} parent=1 // loop_footer
      %s21 = sadd.s32 1, %s17
    $region7: #{tpu_custom_call.1} parent=1 // loop_footer_branch
      %16 = sbr.rel target = $region3
    $region8: #{tpu_custom_call.1} parent=1 // loop_exit
      _
    %766 = vsyncpa [#allocation3], 1
    %s767 = scalar_lea.sflag [#allocation3], 1
    %768 = vsyncpa %s767, 1
    %769 = vsyncpa [#allocation6], 1
    %770 = vsyncpa [#allocation4], 1
    %s771 = scalar_lea.sflag [#allocation4], 1
    %772 = vsyncpa %s771, 1

</llo_original>
